<compile_context>
chip_gen: v7x
topology: tpu7x:2x2x1
jax: 0.10.0
libtpu: 0.0.40
codegen_flags: <defaults>
</compile_context>

<pallas_src>
import numpy as np
import jax
import jax.numpy as jnp
from jax import lax
from jax.experimental import pallas as pl
from jax.experimental.pallas import tpu as pltpu

# ---- config mirroring `cf` in the PyTorch source ----
ACTIVATE_F = "tanh"            # 'relu' or 'tanh'
NODE_COMBINE = "max"           # 'max' or 'mean'
# NOTE: the `is_avg_weighted_RvNN` branch in the reference requires
# max(children_weight) > 1, which never holds (weights are 0 or 1/c_num <= 1),
# so the plain-sum accumulation is the exact semantics.

ENCODE_DIM = 128
EMBEDDING_DIM = 128            # reference's index_copy requires embedding_dim == encode_dim
VOCAB_SIZE = 32
VOCAB_PAD = 128                # lane-aligned K for the fused gather matmul
BATCH_SIZE = 8


def _round8(n):
    return max(8, ((n + 7) // 8) * 8)


# ---------------------------------------------------------------------------
# Fused whole-tree Pallas kernel: one grid step per tree level (post-order).
# ---------------------------------------------------------------------------
def _tree_kernel(parent_ref, emit_ref,                       # SMEM scalar prefetch
                 tok_ref, sel_ref, esel_ref, bias_ref,       # streamed per level
                 embwc_ref, wsum_ref,                        # VMEM-resident weights
                 nodes_ref, comb_ref,                        # outputs
                 csum_ref):                                  # scratch (S, P, E)
    s = pl.program_id(0)
    P = tok_ref.shape[1]
    V = embwc_ref.shape[0]

    @pl.when(s == 0)
    def _init():
        csum_ref[...] = jnp.zeros(csum_ref.shape, csum_ref.dtype)
        if NODE_COMBINE == "max":
            comb_ref[...] = jnp.full(comb_ref.shape, -jnp.inf, comb_ref.dtype)
        else:
            comb_ref[...] = jnp.zeros(comb_ref.shape, comb_ref.dtype)

    # In-kernel embedding gather fused with W_c:  one_hot(tok) @ (embedding @ W_c^T).
    # Dead / padded rows carry token -1 -> all-zero one-hot row -> zero contribution,
    # which matches the reference's zeros().index_copy() scatter.
    tok = tok_ref[0]                                                      # (P, 1) int32
    onehot = (tok == lax.broadcasted_iota(jnp.int32, (P, V), 1)).astype(jnp.float32)
    gathered_wc = jnp.dot(onehot, embwc_ref[...],
                          preferred_element_type=jnp.float32)             # (P, E)  MXU

    # Children sum was accumulated into csum_ref[s] by earlier (child) grid steps.
    # Bias row = b_c + n_live_children * b_sum, folded host-side.
    # TODO(synk): cast the dot operands to bfloat16 (f32 accumulate) on v6e/v7x once
    #             independent levels are batched so M >= 128.
    pre = (gathered_wc
           + jnp.dot(csum_ref[s], wsum_ref[...], preferred_element_type=jnp.float32)
           + bias_ref[0])                                                 # (P, E)

    # Push this level's pre-activation into its parent's children-sum slot.
    # sel is a (P_parent, P_child) 0/1 scatter matrix (child row k -> parent row),
    # so the scatter itself runs on the MXU with no dynamic row stores.
    @pl.when(parent_ref[s] >= 0)
    def _push():
        contrib = jnp.dot(sel_ref[0], pre, preferred_element_type=jnp.float32)
        p = parent_ref[s]
        csum_ref[p] = csum_ref[p] + contrib

    # Emit node_list slab: scatter live rows into (B, E) (rows not addressed stay 0,
    # like batch_node.index_copy in the reference), then activate.
    slab = jnp.dot(esel_ref[0], pre, preferred_element_type=jnp.float32)  # (B, E)
    if ACTIVATE_F == "relu":
        slab = jnp.maximum(slab, 0.0)                                     # VPU
    else:
        slab = jnp.tanh(slab)                                             # EUP
    nodes_ref[0] = slab

    # Running combine over emitted levels only (resident output accumulator).
    @pl.when(emit_ref[s] == 1)
    def _combine():
        if NODE_COMBINE == "max":
            comb_ref[...] = jnp.maximum(comb_ref[...], slab)
        else:
            comb_ref[...] = comb_ref[...] + slab


@jax.jit
def _tree_forward(parent, emit, tok, sel, esel, bias, emb_wc, w_sum_t):
    S_pad, P, _ = tok.shape
    B = esel.shape[1]
    V, E = emb_wc.shape
    grid_spec = pltpu.PrefetchScalarGridSpec(
        num_scalar_prefetch=2,
        grid=(S_pad,),
        in_specs=[
            pl.BlockSpec((1, P, 1), lambda s, *_: (s, 0, 0)),   # tok      (streamed)
            pl.BlockSpec((1, P, P), lambda s, *_: (s, 0, 0)),   # sel      (streamed)
            pl.BlockSpec((1, B, P), lambda s, *_: (s, 0, 0)),   # esel     (streamed)
            pl.BlockSpec((1, 1, E), lambda s, *_: (s, 0, 0)),   # bias     (streamed)
            pl.BlockSpec((V, E),    lambda s, *_: (0, 0)),      # emb@Wc^T (resident)
            pl.BlockSpec((E, E),    lambda s, *_: (0, 0)),      # W_sum^T  (resident)
        ],
        out_specs=(
            pl.BlockSpec((1, B, E), lambda s, *_: (s, 0, 0)),   # per-level node slab
            pl.BlockSpec((B, E),    lambda s, *_: (0, 0)),      # combine accumulator
        ),
        scratch_shapes=[pltpu.VMEM((S_pad, P, E), jnp.float32)],  # children-sum slots
    )
    # TODO(synk): on v7x, add a leading "parallel" grid axis over independent trees /
    #             batch shards to use both TensorCores.
    return pl.pallas_call(
        _tree_kernel,
        out_shape=(jax.ShapeDtypeStruct((S_pad, B, E), jnp.float32),
                   jax.ShapeDtypeStruct((B, E), jnp.float32)),
        grid_spec=grid_spec,
        compiler_params=pltpu.CompilerParams(dimension_semantics=("arbitrary",)),
    )(parent, emit, tok, sel, esel, bias, emb_wc, w_sum_t)


# ---------------------------------------------------------------------------
# Encoder: host-side recursion builds metadata only; one Pallas call per forward.
# ---------------------------------------------------------------------------
class WeightedBatchTreeEncoder:
    def __init__(self, embedding_dim, encode_dim, batch_size, key):
        k_emb, k_wc, k_bc, k_ws, k_bs = jax.random.split(key, 5)
        self.encode_dim = encode_dim
        self.batch_size = batch_size
        self.embedding = 0.1 * jax.random.normal(k_emb, (VOCAB_SIZE, embedding_dim), jnp.float32)
        self.w_c = 0.05 * jax.random.normal(k_wc, (encode_dim, embedding_dim), jnp.float32)
        self.b_c = 0.05 * jax.random.normal(k_bc, (encode_dim,), jnp.float32)
        self.w_sum = 0.05 * jax.random.normal(k_ws, (encode_dim, encode_dim), jnp.float32)
        self.b_sum = 0.05 * jax.random.normal(k_bs, (encode_dim,), jnp.float32)
        # Hoisted parameter prep (done once):
        #   gather+W_c fused table: one_hot(tok) @ (embedding @ W_c^T)
        emb_pad = jnp.zeros((VOCAB_PAD, embedding_dim), jnp.float32).at[:VOCAB_SIZE].set(self.embedding)
        self.emb_wc = emb_pad @ self.w_c.T                   # (VOCAB_PAD, encode_dim)
        self.w_sum_t = self.w_sum.T                          # (encode_dim, encode_dim)
        self._b_c_np = np.asarray(self.b_c, np.float32)
        self._b_sum_np = np.asarray(self.b_sum, np.float32)

    # ---- host-side flattening: mirrors the reference traverse_mul bookkeeping ----
    def _flatten(self, node, batch_index, steps):
        size = len(node)
        if not size:
            return None
        index, children_index = [], []
        current_node, children = [], []
        for i in range(size):
            try:
                if node[i][0] != -1:
                    index.append(i)
                    current_node.append(node[i][0])
                    temp = node[i][1:]
                    for j in range(len(temp)):
                        if temp[j][0] != -1:
                            if len(children_index) <= j:
                                children_index.append([i])
                                children.append([temp[j]])
                            else:
                                children_index[j].append(i)
                                children[j].append(temp[j])
                else:
                    batch_index[i] = -1
            except Exception:
                pass
        # Children first (post-order) so a child's grid step precedes its parent's.
        child_links = []
        for c in range(len(children)):
            bci = [batch_index[i] for i in children_index[c]]
            cs = self._flatten(children[c], bci, steps)
            if cs is not None:
                child_links.append((cs, list(children_index[c])))
        live_bi = [i for i in batch_index if i != -1]
        step = dict(size=size,
                    tok_rows=list(zip(index, current_node)),
                    n_live=len(child_links),
                    emit=(len(live_bi) == size),
                    batch_rows=list(live_bi),
                    parent=-1, parent_rows=None)
        my_id = len(steps)
        steps.append(step)
        for cs, cidx in child_links:
            steps[cs]['parent'] = my_id
            steps[cs]['parent_rows'] = cidx
        return my_id

    def forward(self, x, bs):
        self.batch_size = bs
        steps = []
        self._flatten(x, list(range(bs)), steps)
        S = len(steps)
        S_pad = _round8(S)
        # TODO(synk): group independent levels (equal height) into one grid step so
        #             the matmul M dimension reaches >=128 instead of P.
        P = _round8(max(st['size'] for st in steps))

        tok = np.full((S_pad, P, 1), -1, np.int32)
        sel = np.zeros((S_pad, P, P), np.float32)
        esel = np.zeros((S_pad, bs, P), np.float32)
        bias = np.zeros((S_pad, 1, self.encode_dim), np.float32)
        parent = np.full((S_pad,), -1, np.int32)
        emit = np.zeros((S_pad,), np.int32)
        for s, st in enumerate(steps):
            for (row, t) in st['tok_rows']:
                tok[s, row, 0] = t
            bias[s, 0, :] = self._b_c_np + st['n_live'] * self._b_sum_np
            if st['parent'] >= 0:
                parent[s] = st['parent']
                for k, prow in enumerate(st['parent_rows']):
                    sel[s, prow, k] = 1.0
            if st['emit']:
                emit[s] = 1
                for k, b in enumerate(st['batch_rows']):
                    esel[s, b, k] = 1.0

        nodes_all, combined = _tree_forward(
            jnp.asarray(parent), jnp.asarray(emit),
            jnp.asarray(tok), jnp.asarray(sel), jnp.asarray(esel), jnp.asarray(bias),
            self.emb_wc, self.w_sum_t)

        emit_ids = np.nonzero(emit[:S])[0]
        node_stack = nodes_all[np.asarray(emit_ids, np.int32)]   # (L, bs, E), reference order
        if NODE_COMBINE == "mean":
            combined = combined / jnp.float32(max(1, len(emit_ids)))
        return node_stack, combined


# ---------------------------------------------------------------------------
# Pure-JAX reference following the ORIGINAL per-child structure (for checking)
# ---------------------------------------------------------------------------
def _ref_traverse(node, batch_index, params, bs, node_list):
    size = len(node)
    if not size:
        return None
    emb, w_c, b_c, w_sum, b_sum = params
    index, children_index = [], []
    current_node, children = [], []
    for i in range(size):
        try:
            if node[i][0] != -1:
                index.append(i)
                current_node.append(node[i][0])
                temp = node[i][1:]
                for j in range(len(temp)):
                    if temp[j][0] != -1:
                        if len(children_index) <= j:
                            children_index.append([i])
                            children.append([temp[j]])
                        else:
                            children_index[j].append(i)
                            children[j].append(temp[j])
            else:
                batch_index[i] = -1
        except Exception:
            pass
    scattered = jnp.zeros((size, ENCODE_DIM), jnp.float32).at[
        jnp.asarray(index, jnp.int32)].set(emb[jnp.asarray(current_node, jnp.int32)])
    batch_current = scattered @ w_c.T + b_c
    for c in range(len(children)):
        bci = [batch_index[i] for i in children_index[c]]
        tree = _ref_traverse(children[c], bci, params, bs, node_list)
        if tree is not None:
            scat = jnp.zeros((size, ENCODE_DIM), jnp.float32).at[
                jnp.asarray(children_index[c], jnp.int32)].set(tree)
            batch_current = batch_current + (scat @ w_sum.T + b_sum)
    batch_index = [i for i in batch_index if i != -1]
    if len(batch_index) == size:
        full = jnp.zeros((bs, ENCODE_DIM), jnp.float32).at[
            jnp.asarray(batch_index, jnp.int32)].set(batch_current)
        node_list.append(jnp.maximum(full, 0.0) if ACTIVATE_F == "relu" else jnp.tanh(full))
    return batch_current


# ---------------------------------------------------------------------------
if __name__ == "__main__":
    key = jax.random.PRNGKey(0)

    # Each tree node is [token, child_1, child_2, ...]; batch = list of roots.
    def make_tree(t):
        t = t % VOCAB_SIZE
        return [t,
                [(t + 1) % VOCAB_SIZE, [(t + 3) % VOCAB_SIZE]],
                [(t + 2) % VOCAB_SIZE]]

    x = [make_tree(3 * b + 1) for b in range(BATCH_SIZE)]

    enc = WeightedBatchTreeEncoder(EMBEDDING_DIM, ENCODE_DIM, BATCH_SIZE, key)
    node_stack, combined = enc.forward(x, BATCH_SIZE)
    node_stack = jax.block_until_ready(node_stack)
    combined = jax.block_until_ready(combined)

    # correctness check against a pure-JAX reference with identical params
    params = (enc.embedding, enc.w_c, enc.b_c, enc.w_sum, enc.b_sum)
    ref_nodes = []
    _ref_traverse(x, list(range(BATCH_SIZE)), params, BATCH_SIZE, ref_nodes)
    ref_stack = jnp.stack(ref_nodes)
    ref_comb = jnp.max(ref_stack, axis=0) if NODE_COMBINE == "max" else jnp.mean(ref_stack, axis=0)

    assert node_stack.shape == ref_stack.shape, (node_stack.shape, ref_stack.shape)
    assert combined.shape == (BATCH_SIZE, ENCODE_DIM)
    assert jnp.allclose(node_stack, ref_stack, atol=1e-4, rtol=1e-4)
    assert jnp.allclose(combined, ref_comb, atol=1e-4, rtol=1e-4)

    print("KERNEL_OK")
</pallas_src>

<mosaic_0001>
module attributes {stable_mosaic.version = 11 : i64} {
  func.func @_tree_kernel(%arg0: i32, %arg1: memref<8xi32, #tpu.memory_space<smem>>, %arg2: memref<8xi32, #tpu.memory_space<smem>>, %arg3: memref<1x8x1xi32, #tpu.memory_space<vmem>>, %arg4: memref<1x8x8xf32, #tpu.memory_space<vmem>>, %arg5: memref<1x8x8xf32, #tpu.memory_space<vmem>>, %arg6: memref<1x1x128xf32, #tpu.memory_space<vmem>>, %arg7: memref<128x128xf32, #tpu.memory_space<vmem>>, %arg8: memref<128x128xf32, #tpu.memory_space<vmem>>, %arg9: memref<1x8x128xf32, #tpu.memory_space<vmem>>, %arg10: memref<8x128xf32, #tpu.memory_space<vmem>>, %arg11: memref<8x8x128xf32, #tpu.memory_space<vmem>>) attributes {dimension_semantics = [#tpu.dimension_semantics<arbitrary>], iteration_bounds = array<i64: 8>, scalar_prefetch = 2 : i64, scratch_operands = 1 : i64, tpu.core_type = #tpu.core_type<tc>, window_params = [{transform_indices = @transform_0, window_bounds = array<i64: 1, 8, 1>}, {transform_indices = @transform_1, window_bounds = array<i64: 1, 8, 8>}, {transform_indices = @transform_2, window_bounds = array<i64: 1, 8, 8>}, {transform_indices = @transform_3, window_bounds = array<i64: 1, 1, 128>}, {pipeline_mode = #tpu.pipeline_mode<synchronous>, transform_indices = @transform_4, window_bounds = array<i64: 128, 128>}, {pipeline_mode = #tpu.pipeline_mode<synchronous>, transform_indices = @transform_5, window_bounds = array<i64: 128, 128>}, {transform_indices = @transform_6, window_bounds = array<i64: 1, 8, 128>}, {pipeline_mode = #tpu.pipeline_mode<synchronous>, transform_indices = @transform_7, window_bounds = array<i64: 8, 128>}]} {
    %c0_i32 = arith.constant 0 : i32
    %0 = arith.cmpi eq, %arg0, %c0_i32 : i32
    %1 = arith.extui %0 : i1 to i32
    %c0_i32_0 = arith.constant 0 : i32
    %2 = arith.cmpi ne, %1, %c0_i32_0 : i32
    scf.if %2 {
      %cst_23 = arith.constant 0.000000e+00 : f32
      %39 = vector.broadcast %cst_23 : f32 to vector<8x8x128xf32>
      %c0_24 = arith.constant 0 : index
      %c0_25 = arith.constant 0 : index
      %c0_26 = arith.constant 0 : index
      %40 = vector.load %arg11[%c0_24, %c0_25, %c0_26] : memref<8x8x128xf32, #tpu.memory_space<vmem>>, vector<8x8x128xf32>
      tpu.vector_store %arg11[%c0_24, %c0_25, %c0_26], %39 {strides = array<i32>} : memref<8x8x128xf32, #tpu.memory_space<vmem>>, vector<8x8x128xf32>,
      %cst_27 = arith.constant 0xFF800000 : f32
      %41 = vector.broadcast %cst_27 : f32 to vector<8x128xf32>
      %c0_28 = arith.constant 0 : index
      %c0_29 = arith.constant 0 : index
      %42 = vector.load %arg10[%c0_28, %c0_29] : memref<8x128xf32, #tpu.memory_space<vmem>>, vector<8x128xf32>
      tpu.vector_store %arg10[%c0_28, %c0_29], %41 {strides = array<i32>} : memref<8x128xf32, #tpu.memory_space<vmem>>, vector<8x128xf32>,
    } else {
    }
    %c0 = arith.constant 0 : index
    %c0_1 = arith.constant 0 : index
    %c0_2 = arith.constant 0 : index
    %3 = vector.load %arg3[%c0, %c0_1, %c0_2] : memref<1x8x1xi32, #tpu.memory_space<vmem>>, vector<1x8x1xi32>
    %4 = vector.shape_cast %3 : vector<1x8x1xi32> to vector<8x1xi32>
    %5 = tpu.iota {dimensions = array<i32: 1>} : vector<8x128xi32>
    %6 = vector.broadcast %4 : vector<8x1xi32> to vector<8x128xi32>
    %7 = arith.cmpi eq, %6, %5 : vector<8x128xi32>
    %8 = arith.extui %7 : vector<8x128xi1> to vector<8x128xi32>
    %9 = arith.sitofp %8 : vector<8x128xi32> to vector<8x128xf32>
    %c0_3 = arith.constant 0 : index
    %c0_4 = arith.constant 0 : index
    %10 = vector.load %arg7[%c0_3, %c0_4] : memref<128x128xf32, #tpu.memory_space<vmem>>, vector<128x128xf32>
    %cst = arith.constant dense<0.000000e+00> : vector<8x128xf32>
    %11 = tpu.matmul %9, %10, %cst {dimension_numbers = #tpu.dot_dimension_numbers<[1], [0], [0], [1], [0, 0, 1, 1], [], []>} : vector<8x128xf32>, vector<128x128xf32>, vector<8x128xf32> -> vector<8x128xf32>
    %12 = arith.index_cast %arg0 : i32 to index
    %c0_5 = arith.constant 0 : index
    %c0_6 = arith.constant 0 : index
    %13 = vector.load %arg11[%12, %c0_5, %c0_6] : memref<8x8x128xf32, #tpu.memory_space<vmem>>, vector<1x8x128xf32>
    %14 = vector.shape_cast %13 : vector<1x8x128xf32> to vector<8x128xf32>
    %c0_7 = arith.constant 0 : index
    %c0_8 = arith.constant 0 : index
    %15 = vector.load %arg8[%c0_7, %c0_8] : memref<128x128xf32, #tpu.memory_space<vmem>>, vector<128x128xf32>
    %cst_9 = arith.constant dense<0.000000e+00> : vector<8x128xf32>
    %16 = tpu.matmul %14, %15, %cst_9 {dimension_numbers = #tpu.dot_dimension_numbers<[1], [0], [0], [1], [0, 0, 1, 1], [], []>} : vector<8x128xf32>, vector<128x128xf32>, vector<8x128xf32> -> vector<8x128xf32>
    %17 = arith.addf %11, %16 : vector<8x128xf32>
    %c0_10 = arith.constant 0 : index
    %c0_11 = arith.constant 0 : index
    %c0_12 = arith.constant 0 : index
    %18 = vector.load %arg6[%c0_10, %c0_11, %c0_12] : memref<1x1x128xf32, #tpu.memory_space<vmem>>, vector<1x1x128xf32>
    %19 = vector.shape_cast %18 : vector<1x1x128xf32> to vector<1x128xf32>
    %20 = vector.broadcast %19 : vector<1x128xf32> to vector<8x128xf32>
    %21 = arith.addf %17, %20 : vector<8x128xf32>
    %22 = arith.index_cast %arg0 : i32 to index
    %23 = memref.load %arg1[%22] : memref<8xi32, #tpu.memory_space<smem>>
    %c0_i32_13 = arith.constant 0 : i32
    %24 = arith.cmpi sge, %23, %c0_i32_13 : i32
    %25 = arith.extui %24 : i1 to i32
    %c0_i32_14 = arith.constant 0 : i32
    %26 = arith.cmpi ne, %25, %c0_i32_14 : i32
    scf.if %26 {
      %c0_23 = arith.constant 0 : index
      %c0_24 = arith.constant 0 : index
      %c0_25 = arith.constant 0 : index
      %39 = vector.load %arg4[%c0_23, %c0_24, %c0_25] : memref<1x8x8xf32, #tpu.memory_space<vmem>>, vector<1x8x8xf32>
      %40 = vector.shape_cast %39 : vector<1x8x8xf32> to vector<8x8xf32>
      %cst_26 = arith.constant dense<0.000000e+00> : vector<8x128xf32>
      %41 = tpu.matmul %40, %21, %cst_26 {dimension_numbers = #tpu.dot_dimension_numbers<[1], [0], [0], [1], [0, 0, 1, 1], [], []>} : vector<8x8xf32>, vector<8x128xf32>, vector<8x128xf32> -> vector<8x128xf32>
      %42 = arith.index_cast %arg0 : i32 to index
      %43 = memref.load %arg1[%42] : memref<8xi32, #tpu.memory_space<smem>>
      %44 = arith.index_cast %43 : i32 to index
      %c0_27 = arith.constant 0 : index
      %c0_28 = arith.constant 0 : index
      %45 = vector.load %arg11[%44, %c0_27, %c0_28] : memref<8x8x128xf32, #tpu.memory_space<vmem>>, vector<1x8x128xf32>
      %46 = vector.shape_cast %45 : vector<1x8x128xf32> to vector<8x128xf32>
      %47 = arith.addf %46, %41 : vector<8x128xf32>
      %48 = arith.index_cast %43 : i32 to index
      %c0_29 = arith.constant 0 : index
      %c0_30 = arith.constant 0 : index
      %49 = vector.load %arg11[%48, %c0_29, %c0_30] : memref<8x8x128xf32, #tpu.memory_space<vmem>>, vector<1x8x128xf32>
      %50 = vector.shape_cast %49 : vector<1x8x128xf32> to vector<8x128xf32>
      %51 = vector.shape_cast %47 : vector<8x128xf32> to vector<1x8x128xf32>
      tpu.vector_store %arg11[%48, %c0_29, %c0_30], %51 {strides = array<i32>} : memref<8x8x128xf32, #tpu.memory_space<vmem>>, vector<1x8x128xf32>,
    } else {
    }
    %c0_15 = arith.constant 0 : index
    %c0_16 = arith.constant 0 : index
    %c0_17 = arith.constant 0 : index
    %27 = vector.load %arg5[%c0_15, %c0_16, %c0_17] : memref<1x8x8xf32, #tpu.memory_space<vmem>>, vector<1x8x8xf32>
    %28 = vector.shape_cast %27 : vector<1x8x8xf32> to vector<8x8xf32>
    %cst_18 = arith.constant dense<0.000000e+00> : vector<8x128xf32>
    %29 = tpu.matmul %28, %21, %cst_18 {dimension_numbers = #tpu.dot_dimension_numbers<[1], [0], [0], [1], [0, 0, 1, 1], [], []>} : vector<8x8xf32>, vector<8x128xf32>, vector<8x128xf32> -> vector<8x128xf32>
    %30 = math.tanh %29 : vector<8x128xf32>
    %c0_19 = arith.constant 0 : index
    %c0_20 = arith.constant 0 : index
    %c0_21 = arith.constant 0 : index
    %31 = vector.load %arg9[%c0_19, %c0_20, %c0_21] : memref<1x8x128xf32, #tpu.memory_space<vmem>>, vector<1x8x128xf32>
    %32 = vector.shape_cast %31 : vector<1x8x128xf32> to vector<8x128xf32>
    %33 = vector.shape_cast %30 : vector<8x128xf32> to vector<1x8x128xf32>
    tpu.vector_store %arg9[%c0_19, %c0_20, %c0_21], %33 {strides = array<i32>} : memref<1x8x128xf32, #tpu.memory_space<vmem>>, vector<1x8x128xf32>,
    %34 = arith.index_cast %arg0 : i32 to index
    %35 = memref.load %arg2[%34] : memref<8xi32, #tpu.memory_space<smem>>
    %c1_i32 = arith.constant 1 : i32
    %36 = arith.cmpi eq, %35, %c1_i32 : i32
    %37 = arith.extui %36 : i1 to i32
    %c0_i32_22 = arith.constant 0 : i32
    %38 = arith.cmpi ne, %37, %c0_i32_22 : i32
    scf.if %38 {
      %c0_23 = arith.constant 0 : index
      %c0_24 = arith.constant 0 : index
      %39 = vector.load %arg10[%c0_23, %c0_24] : memref<8x128xf32, #tpu.memory_space<vmem>>, vector<8x128xf32>
      %40 = arith.maximumf %39, %30 : vector<8x128xf32>
      %c0_25 = arith.constant 0 : index
      %c0_26 = arith.constant 0 : index
      %41 = vector.load %arg10[%c0_25, %c0_26] : memref<8x128xf32, #tpu.memory_space<vmem>>, vector<8x128xf32>
      tpu.vector_store %arg10[%c0_25, %c0_26], %40 {strides = array<i32>} : memref<8x128xf32, #tpu.memory_space<vmem>>, vector<8x128xf32>,
    } else {
    }
    return
  }
  func.func @transform_0(%arg0: i32, %arg1: memref<8xi32, #tpu.memory_space<smem>>, %arg2: memref<8xi32, #tpu.memory_space<smem>>) -> (i32, i32, i32) {
    %c0_i32 = arith.constant 0 : i32
    %c0_i32_0 = arith.constant 0 : i32
    %c0_i32_1 = arith.constant 0 : i32
    return %arg0, %c0_i32, %c0_i32_0 : i32, i32, i32
  }
  func.func @transform_1(%arg0: i32, %arg1: memref<8xi32, #tpu.memory_space<smem>>, %arg2: memref<8xi32, #tpu.memory_space<smem>>) -> (i32, i32, i32) {
    %c0_i32 = arith.constant 0 : i32
    %c0_i32_0 = arith.constant 0 : i32
    %c0_i32_1 = arith.constant 0 : i32
    return %arg0, %c0_i32, %c0_i32_0 : i32, i32, i32
  }
  func.func @transform_2(%arg0: i32, %arg1: memref<8xi32, #tpu.memory_space<smem>>, %arg2: memref<8xi32, #tpu.memory_space<smem>>) -> (i32, i32, i32) {
    %c0_i32 = arith.constant 0 : i32
    %c0_i32_0 = arith.constant 0 : i32
    %c0_i32_1 = arith.constant 0 : i32
    return %arg0, %c0_i32, %c0_i32_0 : i32, i32, i32
  }
  func.func @transform_3(%arg0: i32, %arg1: memref<8xi32, #tpu.memory_space<smem>>, %arg2: memref<8xi32, #tpu.memory_space<smem>>) -> (i32, i32, i32) {
    %c0_i32 = arith.constant 0 : i32
    %c0_i32_0 = arith.constant 0 : i32
    %c0_i32_1 = arith.constant 0 : i32
    return %arg0, %c0_i32, %c0_i32_0 : i32, i32, i32
  }
  func.func @transform_4(%arg0: i32, %arg1: memref<8xi32, #tpu.memory_space<smem>>, %arg2: memref<8xi32, #tpu.memory_space<smem>>) -> (i32, i32) {
    %c0_i32 = arith.constant 0 : i32
    %c0_i32_0 = arith.constant 0 : i32
    %c0_i32_1 = arith.constant 0 : i32
    return %c0_i32, %c0_i32_0 : i32, i32
  }
  func.func @transform_5(%arg0: i32, %arg1: memref<8xi32, #tpu.memory_space<smem>>, %arg2: memref<8xi32, #tpu.memory_space<smem>>) -> (i32, i32) {
    %c0_i32 = arith.constant 0 : i32
    %c0_i32_0 = arith.constant 0 : i32
    %c0_i32_1 = arith.constant 0 : i32
    return %c0_i32, %c0_i32_0 : i32, i32
  }
  func.func @transform_6(%arg0: i32, %arg1: memref<8xi32, #tpu.memory_space<smem>>, %arg2: memref<8xi32, #tpu.memory_space<smem>>) -> (i32, i32, i32) {
    %c0_i32 = arith.constant 0 : i32
    %c0_i32_0 = arith.constant 0 : i32
    %c0_i32_1 = arith.constant 0 : i32
    return %arg0, %c0_i32, %c0_i32_0 : i32, i32, i32
  }
  func.func @transform_7(%arg0: i32, %arg1: memref<8xi32, #tpu.memory_space<smem>>, %arg2: memref<8xi32, #tpu.memory_space<smem>>) -> (i32, i32) {
    %c0_i32 = arith.constant 0 : i32
    %c0_i32_0 = arith.constant 0 : i32
    %c0_i32_1 = arith.constant 0 : i32
    return %c0_i32, %c0_i32_0 : i32, i32
  }
}

</mosaic_0001>

<llo_original>
// kernel: _tree_forward.1
$region0: #{_tree_forward.1}
  #allocation0 [shape = 'u32[]', space=smem, size = 0x4, offset = 0x4, fixed_abs, tag = 'smem constant byte address 0x4 - core index']
  #allocation1 [shape = 'u32[144,128]{1,0:T(1,128)}', space=vmem, size = 0x12000, scoped, tag = 'internal scratch']
  #allocation2 [shape = 'f32[8,8,128]{2,1,0:T(8,128)}', space=vmem, size = 0x8000, scoped, tag = 'scratch operand']
  #allocation3 [shape = 's32[1]{0}', space=sflag, size = 0x4, scoped, tag = 'scoped memory for _tree_forward.1']
  #allocation4 [shape = 'u8[512]{0}', space=smem, size = 0x200, scoped, tag = 'prefetched SMEM operand 0']
  #allocation5 [shape = 'u8[512]{0}', space=smem, size = 0x200, scoped, tag = 'prefetched SMEM operand 1']
  %s0 = inlined_call_operand.vmem [shape: s32[8], index: 0, kind: input, shape index: {}]
  %s1 = inlined_call_operand.vmem [shape: s32[8], index: 1, kind: input, shape index: {}]
  %s2 = inlined_call_operand.vmem [shape: s32[8,8,1], index: 2, kind: input, shape index: {}]
  %s3 = inlined_call_operand.vmem [shape: f32[8,8,8], index: 3, kind: input, shape index: {}]
  %s4 = inlined_call_operand.hbm [shape: f32[8,8,8], index: 4, kind: input, shape index: {}]
  %s5 = inlined_call_operand.vmem [shape: f32[8,1,128], index: 5, kind: input, shape index: {}]
  %s6 = inlined_call_operand.hbm [shape: f32[128,128], index: 6, kind: input, shape index: {}]
  %s7 = inlined_call_operand.hbm [shape: f32[128,128], index: 7, kind: input, shape index: {}]
  %s8 = inlined_call_operand.hbm [shape: f32[8,8,128], index: 8, kind: output, shape index: {0}]
  %s9 = inlined_call_operand.hbm [shape: f32[8,128], index: 9, kind: output, shape index: {1}]
  %10 = xla_tuple %s8, %s9
  %s11 = sld [smem:[#allocation0]]
  $region89: #{_tree_forward.1} parent=0
    _
  %s13 = ssub.s32 1, %s11
  %s14 = scalar_select 0, %s13, %s11
  %s15 = sshll.u32 %s0, 4
  %s16 = int_to_ptr.vmem [resolvable:$true] %s15
  %18 = dma.vmem_to_smem %s16, 16, [#allocation4], [#allocation3]
  %s19 = sshll.u32 %s1, 4
  %s20 = int_to_ptr.vmem [resolvable:$true] %s19
  %22 = dma.vmem_to_smem %s20, 16, [#allocation5], [#allocation3]
  %23 = dma.done [#allocation3], 32
  %24 = sfence
  $region1: #{_tree_forward.1} parent=0
    #allocation6 [shape = 'u8[8192]{0}', space=vmem, size = 0x2000, scoped, tag = 'input window, operand 4']
    #allocation7 [shape = 's32[2]{0}', space=sflag, size = 0x8, scoped, tag = 'scoped memory for _tree_forward.1']
    #allocation8 [shape = 's32[2]{0}', space=sflag, size = 0x8, scoped, tag = 'scoped memory for _tree_forward.1']
    #allocation9 [shape = 'u8[65536]{0}', space=vmem, size = 0x10000, scoped, tag = 'input window, operand 6, single buffered']
    #allocation10 [shape = 's32[1]{0}', space=sflag, size = 0x4, scoped, tag = 'scoped memory for _tree_forward.1']
    #allocation11 [shape = 'u8[65536]{0}', space=vmem, size = 0x10000, scoped, tag = 'input window, operand 7, single buffered']
    #allocation12 [shape = 'u8[8192]{0}', space=vmem, size = 0x2000, scoped, tag = 'output window, operand 0']
    #allocation13 [shape = 'u8[4096]{0}', space=vmem, size = 0x1000, scoped, tag = 'output window, operand 1, single buffered']
    #allocation14 [shape = 's32[1]{0}', space=sflag, size = 0x4, scoped, tag = 'scoped memory for _tree_forward.1']
    %25 = vsyncpa [#allocation7], 0
    %s26 = scalar_lea.sflag [#allocation7], 1
    %27 = vsyncpa %s26, 0
    %28 = vsyncpa [#allocation10], 0
    %29 = vsyncpa [#allocation8], 0
    %s30 = scalar_lea.sflag [#allocation8], 1
    %31 = vsyncpa %s30, 0
    %32 = vsyncpa [#allocation14], 0
    loop: start=0, step=1, limit=10
    $region2: #{_tree_forward.1} parent=1 // loop_pre_header
      _
    $region3: #{_tree_forward.1} parent=1 // loop_header
      %s34 = sphi 0, %s38
      %p35 = scmp.ge.s32.totalorder %s34, 10
      %s44 = sphi 0, %s46
      %s47 = sphi 0, %s44
      %s48 = sphi 0, %s47
      %s64 = sphi 0, %s48
      %s70 = sphi 0, %s72
      %s73 = sphi 0, %s70
      %s74 = sphi 0, %s73
      %s90 = sphi 0, %s74
      %s96 = sphi 0, %s98
      %s99 = sphi 0, %s96
      %s100 = sphi 0, %s99
      %s116 = sphi 0, %s100
      %s122 = sphi 0, %s124
      %s125 = sphi 0, %s122
      %s126 = sphi 0, %s125
      %s142 = sphi 0, %s126
      %s146 = sphi 0, %s146
      %s148 = sphi 0, %s146
      %s149 = sphi 0, %s148
      %s163 = sphi 0, %s149
      %s167 = sphi 0, %s167
      %s169 = sphi 0, %s167
      %s170 = sphi 0, %s169
      %s184 = sphi 0, %s170
      %s190 = sphi 0, %s192
      %s193 = sphi 0, %s190
      %s194 = sphi 0, %s193
      %s210 = sphi 0, %s194
      %s214 = sphi 0, %s214
      %s216 = sphi 0, %s214
      %s217 = sphi 0, %s216
      %s231 = sphi 0, %s217
    $region4: #{_tree_forward.1} parent=1 // loop_header_branch
      %37 = sbr.rel (%p35) target = $region8
    $region5: #{_tree_forward.1} parent=1 // loop_body
      %s39 = ssub.s32 %s34, 1
      %s40 = ssub.s32 %s34, 2
      %s41 = sadd.s32 %s34, 1
      %s42 = ssub.s32 %s34, %s41
      %p43 = scmp.eq.s32.totalorder %s42, 0
      %s45 = sadd.s32 %s44, 1
      %s46 = scalar_select %p43, %s44, %s45
      %p49 = pneg %p43
      %p50 = scmp.eq.s32.totalorder %s34, 7
      %p51 = por %p49, %p50
      %p52 = scmp.ne.s32.totalorder %s44, %s47
      %p53 = scmp.eq.s32.totalorder %s34, 0
      %p54 = por %p52, %p53
      %p55 = scmp.ne.s32.totalorder %s44, %s47
      %p56 = scmp.eq.s32.totalorder %s39, 7
      %p57 = por %p55, %p56
      %p58 = scmp.ne.s32.totalorder %s47, %s48
      %p59 = scmp.eq.s32.totalorder %s39, 0
      %p60 = por %p58, %p59
      %p61 = scmp.ne.s32.totalorder %s47, %s48
      %p62 = scmp.eq.s32.totalorder %s40, 7
      %p63 = por %p61, %p62
      %p65 = scmp.ne.s32.totalorder %s48, %s64
      %p66 = scmp.eq.s32.totalorder %s40, 0
      %p67 = por %p65, %p66
      %s68 = ssub.s32 %s34, %s41
      %p69 = scmp.eq.s32.totalorder %s68, 0
      %s71 = sadd.s32 %s70, 1
      %s72 = scalar_select %p69, %s70, %s71
      %p75 = pneg %p69
      %p76 = scmp.eq.s32.totalorder %s34, 7
      %p77 = por %p75, %p76
      %p78 = scmp.ne.s32.totalorder %s70, %s73
      %p79 = scmp.eq.s32.totalorder %s34, 0
      %p80 = por %p78, %p79
      %p81 = scmp.ne.s32.totalorder %s70, %s73
      %p82 = scmp.eq.s32.totalorder %s39, 7
      %p83 = por %p81, %p82
      %p84 = scmp.ne.s32.totalorder %s73, %s74
      %p85 = scmp.eq.s32.totalorder %s39, 0
      %p86 = por %p84, %p85
      %p87 = scmp.ne.s32.totalorder %s73, %s74
      %p88 = scmp.eq.s32.totalorder %s40, 7
      %p89 = por %p87, %p88
      %p91 = scmp.ne.s32.totalorder %s74, %s90
      %p92 = scmp.eq.s32.totalorder %s40, 0
      %p93 = por %p91, %p92
      %s94 = ssub.s32 %s34, %s41
      %p95 = scmp.eq.s32.totalorder %s94, 0
      %s97 = sadd.s32 %s96, 1
      %s98 = scalar_select %p95, %s96, %s97
      %p101 = pneg %p95
      %p102 = scmp.eq.s32.totalorder %s34, 7
      %p103 = por %p101, %p102
      %p104 = scmp.ne.s32.totalorder %s96, %s99
      %p105 = scmp.eq.s32.totalorder %s34, 0
      %p106 = por %p104, %p105
      %p107 = scmp.ne.s32.totalorder %s96, %s99
      %p108 = scmp.eq.s32.totalorder %s39, 7
      %p109 = por %p107, %p108
      %p110 = scmp.ne.s32.totalorder %s99, %s100
      %p111 = scmp.eq.s32.totalorder %s39, 0
      %p112 = por %p110, %p111
      %p113 = scmp.ne.s32.totalorder %s99, %s100
      %p114 = scmp.eq.s32.totalorder %s40, 7
      %p115 = por %p113, %p114
      %p117 = scmp.ne.s32.totalorder %s100, %s116
      %p118 = scmp.eq.s32.totalorder %s40, 0
      %p119 = por %p117, %p118
      %s120 = ssub.s32 %s34, %s41
      %p121 = scmp.eq.s32.totalorder %s120, 0
      %s123 = sadd.s32 %s122, 1
      %s124 = scalar_select %p121, %s122, %s123
      %p127 = pneg %p121
      %p128 = scmp.eq.s32.totalorder %s34, 7
      %p129 = por %p127, %p128
      %p130 = scmp.ne.s32.totalorder %s122, %s125
      %p131 = scmp.eq.s32.totalorder %s34, 0
      %p132 = por %p130, %p131
      %p133 = scmp.ne.s32.totalorder %s122, %s125
      %p134 = scmp.eq.s32.totalorder %s39, 7
      %p135 = por %p133, %p134
      %p136 = scmp.ne.s32.totalorder %s125, %s126
      %p137 = scmp.eq.s32.totalorder %s39, 0
      %p138 = por %p136, %p137
      %p139 = scmp.ne.s32.totalorder %s125, %s126
      %p140 = scmp.eq.s32.totalorder %s40, 7
      %p141 = por %p139, %p140
      %p143 = scmp.ne.s32.totalorder %s126, %s142
      %p144 = scmp.eq.s32.totalorder %s40, 0
      %p145 = por %p143, %p144
      %s147 = sadd.s32 %s146, 1
      %p150 = scmp.eq.s32.totalorder %s34, 7
      %p151 = scmp.ne.s32.totalorder %s146, %s148
      %p152 = scmp.eq.s32.totalorder %s34, 0
      %p153 = por %p151, %p152
      %p154 = scmp.ne.s32.totalorder %s146, %s148
      %p155 = scmp.eq.s32.totalorder %s39, 7
      %p156 = por %p154, %p155
      %p157 = scmp.ne.s32.totalorder %s148, %s149
      %p158 = scmp.eq.s32.totalorder %s39, 0
      %p159 = por %p157, %p158
      %p160 = scmp.ne.s32.totalorder %s148, %s149
      %p161 = scmp.eq.s32.totalorder %s40, 7
      %p162 = por %p160, %p161
      %p164 = scmp.ne.s32.totalorder %s149, %s163
      %p165 = scmp.eq.s32.totalorder %s40, 0
      %p166 = por %p164, %p165
      %s168 = sadd.s32 %s167, 1
      %p171 = scmp.eq.s32.totalorder %s34, 7
      %p172 = scmp.ne.s32.totalorder %s167, %s169
      %p173 = scmp.eq.s32.totalorder %s34, 0
      %p174 = por %p172, %p173
      %p175 = scmp.ne.s32.totalorder %s167, %s169
      %p176 = scmp.eq.s32.totalorder %s39, 7
      %p177 = por %p175, %p176
      %p178 = scmp.ne.s32.totalorder %s169, %s170
      %p179 = scmp.eq.s32.totalorder %s39, 0
      %p180 = por %p178, %p179
      %p181 = scmp.ne.s32.totalorder %s169, %s170
      %p182 = scmp.eq.s32.totalorder %s40, 7
      %p183 = por %p181, %p182
      %p185 = scmp.ne.s32.totalorder %s170, %s184
      %p186 = scmp.eq.s32.totalorder %s40, 0
      %p187 = por %p185, %p186
      %s188 = ssub.s32 %s34, %s41
      %p189 = scmp.eq.s32.totalorder %s188, 0
      %s191 = sadd.s32 %s190, 1
      %s192 = scalar_select %p189, %s190, %s191
      %p195 = pneg %p189
      %p196 = scmp.eq.s32.totalorder %s34, 7
      %p197 = por %p195, %p196
      %p198 = scmp.ne.s32.totalorder %s190, %s193
      %p199 = scmp.eq.s32.totalorder %s34, 0
      %p200 = por %p198, %p199
      %p201 = scmp.ne.s32.totalorder %s190, %s193
      %p202 = scmp.eq.s32.totalorder %s39, 7
      %p203 = por %p201, %p202
      %p204 = scmp.ne.s32.totalorder %s193, %s194
      %p205 = scmp.eq.s32.totalorder %s39, 0
      %p206 = por %p204, %p205
      %p207 = scmp.ne.s32.totalorder %s193, %s194
      %p208 = scmp.eq.s32.totalorder %s40, 7
      %p209 = por %p207, %p208
      %p211 = scmp.ne.s32.totalorder %s194, %s210
      %p212 = scmp.eq.s32.totalorder %s40, 0
      %p213 = por %p211, %p212
      %s215 = sadd.s32 %s214, 1
      %p218 = scmp.eq.s32.totalorder %s34, 7
      %p219 = scmp.ne.s32.totalorder %s214, %s216
      %p220 = scmp.eq.s32.totalorder %s34, 0
      %p221 = por %p219, %p220
      %p222 = scmp.ne.s32.totalorder %s214, %s216
      %p223 = scmp.eq.s32.totalorder %s39, 7
      %p224 = por %p222, %p223
      %p225 = scmp.ne.s32.totalorder %s216, %s217
      %p226 = scmp.eq.s32.totalorder %s39, 0
      %p227 = por %p225, %p226
      %p228 = scmp.ne.s32.totalorder %s216, %s217
      %p229 = scmp.eq.s32.totalorder %s40, 7
      %p230 = por %p228, %p229
      %p232 = scmp.ne.s32.totalorder %s217, %s231
      %p233 = scmp.eq.s32.totalorder %s40, 0
      %p234 = por %p232, %p233
      %p235 = scmp.le.s32.totalorder 1, %s34
      %p236 = scmp.lt.s32.totalorder %s34, 9
      %p237 = pnand %p235, %p236
      %p238 = pneg %p237
      // Predicated region
      $region9: #{_tree_forward.1} parent=5 // pred_check
        _
      $region10: #{_tree_forward.1} parent=5 // pred_check_branch
        %240 = sbr.rel (%p237) target = $region12
      $region11: #{_tree_forward.1} parent=5 // pred_region
        %s241 = ssub.s32 %s34, 1
        // Predicated region
        $region13: #{_tree_forward.1} parent=11 // pred_check
          %p242 = pneg %p159
        $region14: #{_tree_forward.1} parent=11 // pred_check_branch
          %244 = sbr.rel (%p242) target = $region16
        $region15: #{_tree_forward.1} parent=11 // pred_region
          %s246 = ssub.s32 2048, 2048
          %247 = vsyncadd [#allocation10], %s246
          %s248 = sshll.u32 [#allocation9], 4
          %s249 = int_to_ptr.vmem [resolvable:$true] %s248
          %254 = dma.hbm_to_vmem [thread:$0]  %s6, 2048, %s249, [#allocation10], 128, 128, 8
        $region16: #{_tree_forward.1} parent=11 // pred_fallthru
          _
        // Predicated region
        $region17: #{_tree_forward.1} parent=11 // pred_check
          %p255 = pneg %p180
        $region18: #{_tree_forward.1} parent=11 // pred_check_branch
          %257 = sbr.rel (%p255) target = $region20
        $region19: #{_tree_forward.1} parent=11 // pred_region
          %s259 = ssub.s32 2048, 2048
          %260 = vsyncadd [#allocation10], %s259
          %s261 = sshll.u32 [#allocation11], 4
          %s262 = int_to_ptr.vmem [resolvable:$true] %s261
          %267 = dma.hbm_to_vmem [thread:$0]  %s7, 2048, %s262, [#allocation10], 128, 128, 8
        $region20: #{_tree_forward.1} parent=11 // pred_fallthru
          _
      $region12: #{_tree_forward.1} parent=5 // pred_fallthru
        _
      %p268 = scmp.lt.s32.totalorder %s34, 8
      // Predicated region
      $region21: #{_tree_forward.1} parent=5 // pred_check
        %p269 = pneg %p268
      $region22: #{_tree_forward.1} parent=5 // pred_check_branch
        %271 = sbr.rel (%p269) target = $region24
      $region23: #{_tree_forward.1} parent=5 // pred_region
        // Predicated region
        $region25: #{_tree_forward.1} parent=23 // pred_check
          %p272 = pneg %p54
        $region26: #{_tree_forward.1} parent=23 // pred_check_branch
          %274 = sbr.rel (%p272) target = $region28
        $region27: #{_tree_forward.1} parent=23 // pred_region
          %p275 = scmp.lt.s32.totalorder %s34, 7
          %s276 = scalar_select %p275, %s34, 7
          %s277 = smul.addr %s276, 8
          %s278 = scalar_lea.vmem %s2, %s277
        $region28: #{_tree_forward.1} parent=23 // pred_fallthru
          _
        // Predicated region
        $region29: #{_tree_forward.1} parent=23 // pred_check
          %p279 = pneg %p80
        $region30: #{_tree_forward.1} parent=23 // pred_check_branch
          %281 = sbr.rel (%p279) target = $region32
        $region31: #{_tree_forward.1} parent=23 // pred_region
          %p282 = scmp.lt.s32.totalorder %s34, 7
          %s283 = scalar_select %p282, %s34, 7
          %s284 = smul.addr %s283, 8
          %s285 = scalar_lea.vmem %s3, %s284
        $region32: #{_tree_forward.1} parent=23 // pred_fallthru
          _
        // Predicated region
        $region33: #{_tree_forward.1} parent=23 // pred_check
          %p286 = pneg %p106
        $region34: #{_tree_forward.1} parent=23 // pred_check_branch
          %288 = sbr.rel (%p286) target = $region36
        $region35: #{_tree_forward.1} parent=23 // pred_region
          %s289 = sand.u32 %s96, 1
          %s290 = scalar_lea.sflag [#allocation7], %s289
          %s291 = sand.u32 %s96, 1
          %s292 = smul.addr %s291, 8
          %s293 = scalar_lea.vmem [#allocation6], %s292
          %s295 = ssub.s32 128, 128
          %296 = vsyncadd %s290, %s295
          %s297 = smul.addr %s34, 128
          %s298 = scalar_lea.hbm %s4, %s297
          %s300 = sshll.u32 %s293, 4
          %s301 = int_to_ptr.vmem [resolvable:$true] %s300
          %303 = dma.hbm_to_vmem [thread:$0]  %s298, 128, %s301, %s290
        $region36: #{_tree_forward.1} parent=23 // pred_fallthru
          _
        // Predicated region
        $region37: #{_tree_forward.1} parent=23 // pred_check
          %p304 = pneg %p132
        $region38: #{_tree_forward.1} parent=23 // pred_check_branch
          %306 = sbr.rel (%p304) target = $region40
        $region39: #{_tree_forward.1} parent=23 // pred_region
          %p307 = scmp.lt.s32.totalorder %s34, 7
          %s308 = scalar_select %p307, %s34, 7
          %s309 = scalar_lea.vmem %s5, %s308
        $region40: #{_tree_forward.1} parent=23 // pred_fallthru
          _
      $region24: #{_tree_forward.1} parent=5 // pred_fallthru
        _
      %p310 = scmp.le.s32.totalorder 1, %s34
      %p311 = scmp.lt.s32.totalorder %s34, 9
      %p312 = pnand %p310, %p311
      %p313 = pneg %p312
      // Predicated region
      $region41: #{_tree_forward.1} parent=5 // pred_check
        _
      $region42: #{_tree_forward.1} parent=5 // pred_check_branch
        %315 = sbr.rel (%p312) target = $region44
      $region43: #{_tree_forward.1} parent=5 // pred_region
        %s316 = ssub.s32 %s34, 1
        %s317 = sand.u32 %s99, 1
        %s318 = scalar_lea.sflag [#allocation7], %s317
        %s319 = sand.u32 %s99, 1
        %s320 = smul.addr %s319, 8
        %s321 = scalar_lea.vmem [#allocation6], %s320
        // Predicated region
        $region45: #{_tree_forward.1} parent=43 // pred_check
          %p322 = pneg %p112
        $region46: #{_tree_forward.1} parent=43 // pred_check_branch
          %324 = sbr.rel (%p322) target = $region48
        $region47: #{_tree_forward.1} parent=43 // pred_region
          %325 = dma.done %s318, 128
        $region48: #{_tree_forward.1} parent=43 // pred_fallthru
          _
        // Predicated region
        $region49: #{_tree_forward.1} parent=43 // pred_check
          %p326 = pneg %p159
        $region50: #{_tree_forward.1} parent=43 // pred_check_branch
          %328 = sbr.rel (%p326) target = $region52
        $region51: #{_tree_forward.1} parent=43 // pred_region
          %329 = dma.done [#allocation10], 2048
        $region52: #{_tree_forward.1} parent=43 // pred_fallthru
          _
        // Predicated region
        $region53: #{_tree_forward.1} parent=43 // pred_check
          %p330 = pneg %p180
        $region54: #{_tree_forward.1} parent=43 // pred_check_branch
          %332 = sbr.rel (%p330) target = $region56
        $region55: #{_tree_forward.1} parent=43 // pred_region
          %333 = dma.done [#allocation10], 2048
        $region56: #{_tree_forward.1} parent=43 // pred_fallthru
          _
        %p334 = scmp.lt.s32.totalorder %s39, 7
        %s335 = scalar_select %p334, %s39, 7
        %s336 = smul.addr %s335, 8
        %s337 = scalar_lea.vmem %s2, %s336
        %p338 = pneg %p60
        %p339 = pneg %p57
        %p340 = scmp.lt.s32.totalorder %s39, 7
        %s341 = scalar_select %p340, %s39, 7
        %s342 = smul.addr %s341, 8
        %s343 = scalar_lea.vmem %s3, %s342
        %p344 = pneg %p86
        %p345 = pneg %p83
        %s346 = sand.u32 %s99, 1
        %s347 = scalar_lea.sflag [#allocation7], %s346
        %s348 = sand.u32 %s99, 1
        %s349 = smul.addr %s348, 8
        %s350 = scalar_lea.vmem [#allocation6], %s349
        %p351 = pneg %p112
        %p352 = pneg %p109
        %p353 = scmp.lt.s32.totalorder %s39, 7
        %s354 = scalar_select %p353, %s39, 7
        %s355 = scalar_lea.vmem %s5, %s354
        %p356 = pneg %p138
        %p357 = pneg %p135
        %p358 = pneg %p159
        %p359 = pneg %p156
        %p360 = pneg %p180
        %p361 = pneg %p177
        %p362 = pneg %p206
        %p363 = pneg %p203
        %s364 = sand.u32 %s193, 1
        %s365 = scalar_lea.sflag [#allocation8], %s364
        %s366 = sand.u32 %s193, 1
        %s367 = smul.addr %s366, 8
        %s368 = scalar_lea.vmem [#allocation12], %s367
        %p369 = pneg %p227
        %p370 = pneg %p224
        %p371 = scmp.lt.s32.totalorder %s39, 7
        %s372 = scalar_select %p371, %s39, 7
        %s373 = smul.addr %s372, 8
        %s374 = scalar_lea.vmem %s2, %s373
        %p375 = scmp.lt.s32.totalorder %s39, 7
        %s376 = scalar_select %p375, %s39, 7
        %s377 = smul.addr %s376, 8
        %s378 = scalar_lea.vmem %s3, %s377
        %p379 = scmp.lt.s32.totalorder %s39, 7
        %s380 = scalar_select %p379, %s39, 7
        %s381 = scalar_lea.vmem %s5, %s380
        %p382 = scmp.eq.s32.totalorder %s39, 0
        // Predicated region
        $region57: #{_tree_forward.1} parent=43 // pred_check
          %p383 = pneg %p382
        $region58: #{_tree_forward.1} parent=43 // pred_check_branch
          %385 = sbr.rel (%p383) target = $region60
        $region59: #{_tree_forward.1} parent=43 // pred_region
          %386 = vst [vmem:[#allocation2] sm:$0xff] 0.0
          %387 = vst [vmem:[#allocation2 + $0x8] sm:$0xff] 0.0
          %388 = vst [vmem:[#allocation2 + $0x10] sm:$0xff] 0.0
          %389 = vst [vmem:[#allocation2 + $0x18] sm:$0xff] 0.0
          %390 = vst [vmem:[#allocation2 + $0x20] sm:$0xff] 0.0
          %391 = vst [vmem:[#allocation2 + $0x28] sm:$0xff] 0.0
          %392 = vst [vmem:[#allocation2 + $0x30] sm:$0xff] 0.0
          %393 = vst [vmem:[#allocation2 + $0x38] sm:$0xff] 0.0
          %394 = vst [vmem:[#allocation13] sm:$0xff] -inf
        $region60: #{_tree_forward.1} parent=43 // pred_fallthru
          _
        %v395 = vld [vmem:[%s374] sm:$0xff]
        %v396 = vlaneseq
        %v397 = vand.u32 %v396, 127
        %398 = vset.pattern.permute.xlu0 0
        %399 = vperm.xlu0 %398, %v395
        %v400 = vpop.permute.xlu0 %399
        %vm401 = vcmp.eq.s32.totalorder %v400, %v397
        %v402 = vsel %vm401, 1, 0
        %v403 = vcvt.s32.f32 %v402
        %v404 = vld [vmem:[#allocation9] sm:$0xff]
        %v405 = vld [vmem:[#allocation9 + $0x8] sm:$0xff]
        %v406 = vld [vmem:[#allocation9 + $0x10] sm:$0xff]
        %v407 = vld [vmem:[#allocation9 + $0x18] sm:$0xff]
        %v408 = vld [vmem:[#allocation9 + $0x20] sm:$0xff]
        %v409 = vld [vmem:[#allocation9 + $0x28] sm:$0xff]
        %v410 = vld [vmem:[#allocation9 + $0x30] sm:$0xff]
        %v411 = vld [vmem:[#allocation9 + $0x38] sm:$0xff]
        %v412 = vld [vmem:[#allocation9 + $0x40] sm:$0xff]
        %v413 = vld [vmem:[#allocation9 + $0x48] sm:$0xff]
        %v414 = vld [vmem:[#allocation9 + $0x50] sm:$0xff]
        %v415 = vld [vmem:[#allocation9 + $0x58] sm:$0xff]
        %v416 = vld [vmem:[#allocation9 + $0x60] sm:$0xff]
        %v417 = vld [vmem:[#allocation9 + $0x68] sm:$0xff]
        %v418 = vld [vmem:[#allocation9 + $0x70] sm:$0xff]
        %v419 = vld [vmem:[#allocation9 + $0x78] sm:$0xff]
        %s420 = smul.u32 %s39, 8
        %s421 = scalar_lea.vmem [#allocation2], %s420
        %v422 = vld [vmem:[%s421] sm:$0xff]
        %v423 = vld [vmem:[#allocation11] sm:$0xff]
        %v424 = vld [vmem:[#allocation11 + $0x8] sm:$0xff]
        %v425 = vld [vmem:[#allocation11 + $0x10] sm:$0xff]
        %v426 = vld [vmem:[#allocation11 + $0x18] sm:$0xff]
        %v427 = vld [vmem:[#allocation11 + $0x20] sm:$0xff]
        %v428 = vld [vmem:[#allocation11 + $0x28] sm:$0xff]
        %v429 = vld [vmem:[#allocation11 + $0x30] sm:$0xff]
        %v430 = vld [vmem:[#allocation11 + $0x38] sm:$0xff]
        %v431 = vld [vmem:[#allocation11 + $0x40] sm:$0xff]
        %v432 = vld [vmem:[#allocation11 + $0x48] sm:$0xff]
        %v433 = vld [vmem:[#allocation11 + $0x50] sm:$0xff]
        %v434 = vld [vmem:[#allocation11 + $0x58] sm:$0xff]
        %v435 = vld [vmem:[#allocation11 + $0x60] sm:$0xff]
        %v436 = vld [vmem:[#allocation11 + $0x68] sm:$0xff]
        %v437 = vld [vmem:[#allocation11 + $0x70] sm:$0xff]
        %v438 = vld [vmem:[#allocation11 + $0x78] sm:$0xff]
        %439 = vmatprep.subr.mxu0 0.0
        %440 = vmatpush1.msra.mxu0 %v423
        %441 = vmatprep.subr.mxu0 0.0
        %442 = vmatpush1.msra.mxu0 %v424
        %443 = vmatprep.subr.mxu0 0.0
        %444 = vmatpush1.msra.mxu0 %v425
        %445 = vmatprep.subr.mxu0 0.0
        %446 = vmatpush1.msra.mxu0 %v426
        %447 = vmatprep.subr.mxu0 0.0
        %448 = vmatpush1.msra.mxu0 %v427
        %449 = vmatprep.subr.mxu0 0.0
        %450 = vmatpush1.msra.mxu0 %v428
        %451 = vmatprep.subr.mxu0 0.0
        %452 = vmatpush1.msra.mxu0 %v429
        %453 = vmatprep.subr.mxu0 0.0
        %454 = vmatpush1.msra.mxu0 %v430
        %455 = vmatprep.subr.mxu0 0.0
        %456 = vmatpush1.msra.mxu0 %v431
        %457 = vmatprep.subr.mxu0 0.0
        %458 = vmatpush1.msra.mxu0 %v432
        %459 = vmatprep.subr.mxu0 0.0
        %460 = vmatpush1.msra.mxu0 %v433
        %461 = vmatprep.subr.mxu0 0.0
        %462 = vmatpush1.msra.mxu0 %v434
        %463 = vmatprep.subr.mxu0 0.0
        %464 = vmatpush1.msra.mxu0 %v435
        %465 = vmatprep.subr.mxu0 0.0
        %466 = vmatpush1.msra.mxu0 %v436
        %467 = vmatprep.subr.mxu0 0.0
        %468 = vmatpush1.msra.mxu0 %v437
        %469 = vmatprep.subr.mxu0 0.0
        %470 = vmatpush1.msra.mxu0 %v438
        %471 = vmatprep.subr.mxu0 0.0
        %472 = vmatpush1.msra.mxu0 0.0
        %473 = vmatprep.subr.mxu0 0.0
        %474 = vmatpush1.msra.mxu0 0.0
        %475 = vmatprep.subr.mxu0 0.0
        %476 = vmatpush1.msra.mxu0 0.0
        %477 = vmatprep.subr.mxu0 0.0
        %478 = vmatpush1.msra.mxu0 0.0
        %479 = vmatprep.subr.mxu0 0.0
        %480 = vmatpush1.msra.mxu0 0.0
        %481 = vmatprep.subr.mxu0 0.0
        %482 = vmatpush1.msra.mxu0 0.0
        %483 = vmatprep.subr.mxu0 0.0
        %484 = vmatpush1.msra.mxu0 0.0
        %485 = vmatprep.subr.mxu0 0.0
        %486 = vmatpush1.msra.mxu0 0.0
        %487 = vmatprep.subr.mxu0 0.0
        %488 = vmatpush1.msra.mxu0 0.0
        %489 = vmatprep.subr.mxu0 0.0
        %490 = vmatpush1.msra.mxu0 0.0
        %491 = vmatprep.subr.mxu0 0.0
        %492 = vmatpush1.msra.mxu0 0.0
        %493 = vmatprep.subr.mxu0 0.0
        %494 = vmatpush1.msra.mxu0 0.0
        %495 = vmatprep.subr.mxu0 0.0
        %496 = vmatpush1.msra.mxu0 0.0
        %497 = vmatprep.subr.mxu0 0.0
        %498 = vmatpush1.msra.mxu0 0.0
        %499 = vmatprep.subr.mxu0 0.0
        %500 = vmatpush1.msra.mxu0 0.0
        %501 = vmatprep.subr.mxu0 0.0
        %502 = vmatpush1.msra.mxu0 0.0
        %503 = vmatprep.mubr.f32.mxu0 0.0
        %504 = vmatmul.mubr.f32.gmra.mrb[0].mxu0 %v422
        %v505 = vpop.f32.mrb[0].mxu0
        %v506 = vadd.f32 0.0, %v505
        %v507 = vpop.f32.mrb[0].mxu0
        %508 = vdwg.mxu0
        %509 = vmatprep.subr.mxu0 0.0
        %510 = vmatpush1.msra.mxu0 %v404
        %511 = vmatprep.subr.mxu0 0.0
        %512 = vmatpush1.msra.mxu0 %v405
        %513 = vmatprep.subr.mxu0 0.0
        %514 = vmatpush1.msra.mxu0 %v406
        %515 = vmatprep.subr.mxu0 0.0
        %516 = vmatpush1.msra.mxu0 %v407
        %517 = vmatprep.subr.mxu0 0.0
        %518 = vmatpush1.msra.mxu0 %v408
        %519 = vmatprep.subr.mxu0 0.0
        %520 = vmatpush1.msra.mxu0 %v409
        %521 = vmatprep.subr.mxu0 0.0
        %522 = vmatpush1.msra.mxu0 %v410
        %523 = vmatprep.subr.mxu0 0.0
        %524 = vmatpush1.msra.mxu0 %v411
        %525 = vmatprep.subr.mxu0 0.0
        %526 = vmatpush1.msra.mxu0 %v412
        %527 = vmatprep.subr.mxu0 0.0
        %528 = vmatpush1.msra.mxu0 %v413
        %529 = vmatprep.subr.mxu0 0.0
        %530 = vmatpush1.msra.mxu0 %v414
        %531 = vmatprep.subr.mxu0 0.0
        %532 = vmatpush1.msra.mxu0 %v415
        %533 = vmatprep.subr.mxu0 0.0
        %534 = vmatpush1.msra.mxu0 %v416
        %535 = vmatprep.subr.mxu0 0.0
        %536 = vmatpush1.msra.mxu0 %v417
        %537 = vmatprep.subr.mxu0 0.0
        %538 = vmatpush1.msra.mxu0 %v418
        %539 = vmatprep.subr.mxu0 0.0
        %540 = vmatpush1.msra.mxu0 %v419
        %541 = vmatprep.subr.mxu0 0.0
        %542 = vmatpush1.msra.mxu0 0.0
        %543 = vmatprep.subr.mxu0 0.0
        %544 = vmatpush1.msra.mxu0 0.0
        %545 = vmatprep.subr.mxu0 0.0
        %546 = vmatpush1.msra.mxu0 0.0
        %547 = vmatprep.subr.mxu0 0.0
        %548 = vmatpush1.msra.mxu0 0.0
        %549 = vmatprep.subr.mxu0 0.0
        %550 = vmatpush1.msra.mxu0 0.0
        %551 = vmatprep.subr.mxu0 0.0
        %552 = vmatpush1.msra.mxu0 0.0
        %553 = vmatprep.subr.mxu0 0.0
        %554 = vmatpush1.msra.mxu0 0.0
        %555 = vmatprep.subr.mxu0 0.0
        %556 = vmatpush1.msra.mxu0 0.0
        %557 = vmatprep.subr.mxu0 0.0
        %558 = vmatpush1.msra.mxu0 0.0
        %559 = vmatprep.subr.mxu0 0.0
        %560 = vmatpush1.msra.mxu0 0.0
        %561 = vmatprep.subr.mxu0 0.0
        %562 = vmatpush1.msra.mxu0 0.0
        %563 = vmatprep.subr.mxu0 0.0
        %564 = vmatpush1.msra.mxu0 0.0
        %565 = vmatprep.subr.mxu0 0.0
        %566 = vmatpush1.msra.mxu0 0.0
        %567 = vmatprep.subr.mxu0 0.0
        %568 = vmatpush1.msra.mxu0 0.0
        %569 = vmatprep.subr.mxu0 0.0
        %570 = vmatpush1.msra.mxu0 0.0
        %571 = vmatprep.subr.mxu0 0.0
        %572 = vmatpush1.msra.mxu0 0.0
        %573 = vmatprep.mubr.f32.mxu0 0.0
        %574 = vmatmul.mubr.f32.gmra.mrb[0].mxu0 %v403
        %v575 = vpop.f32.mrb[0].mxu0
        %v576 = vadd.f32 %v506, %v575
        %v577 = vpop.f32.mrb[0].mxu0
        %578 = vdwg.mxu0
        %v579 = vld [vmem:[%s381] sm:$0x1]
        %v581 = vlaneseq
        %v582 = vshrl.u32 %v581, 7
        %v583 = vsub.s32 0, %v582
        %v584 = vrot.slane %v579, %v583
        %v586 = vadd.f32 %v576, %v584
        %s587 = sld [smem:[#allocation4 + %s39]]
        %p588 = scmp.ge.s32.totalorder %s587, 0
        // Predicated region
        $region61: #{_tree_forward.1} parent=43 // pred_check
          %p589 = pneg %p588
        $region62: #{_tree_forward.1} parent=43 // pred_check_branch
          %591 = sbr.rel (%p589) target = $region64
        $region63: #{_tree_forward.1} parent=43 // pred_region
          %v592 = vld [vmem:[%s378] sm:$0xff]
          %vm593 = vcmask 64512
          %v595 = vsel %vm593, %v592, 0
          %597 = vmatprep.subr.mxu0 0.0
          %598 = vmatpush1.msra.mxu0 %v586
          %599 = vmatprep.subr.mxu0 0.0
          %600 = vmatpush1.msra.mxu0 0.0
          %601 = vmatprep.subr.mxu0 0.0
          %602 = vmatpush1.msra.mxu0 0.0
          %603 = vmatprep.subr.mxu0 0.0
          %604 = vmatpush1.msra.mxu0 0.0
          %605 = vmatprep.subr.mxu0 0.0
          %606 = vmatpush1.msra.mxu0 0.0
          %607 = vmatprep.subr.mxu0 0.0
          %608 = vmatpush1.msra.mxu0 0.0
          %609 = vmatprep.subr.mxu0 0.0
          %610 = vmatpush1.msra.mxu0 0.0
          %611 = vmatprep.subr.mxu0 0.0
          %612 = vmatpush1.msra.mxu0 0.0
          %613 = vmatprep.subr.mxu0 0.0
          %614 = vmatpush1.msra.mxu0 0.0
          %615 = vmatprep.subr.mxu0 0.0
          %616 = vmatpush1.msra.mxu0 0.0
          %617 = vmatprep.subr.mxu0 0.0
          %618 = vmatpush1.msra.mxu0 0.0
          %619 = vmatprep.subr.mxu0 0.0
          %620 = vmatpush1.msra.mxu0 0.0
          %621 = vmatprep.subr.mxu0 0.0
          %622 = vmatpush1.msra.mxu0 0.0
          %623 = vmatprep.subr.mxu0 0.0
          %624 = vmatpush1.msra.mxu0 0.0
          %625 = vmatprep.subr.mxu0 0.0
          %626 = vmatpush1.msra.mxu0 0.0
          %627 = vmatprep.subr.mxu0 0.0
          %628 = vmatpush1.msra.mxu0 0.0
          %629 = vmatprep.subr.mxu0 0.0
          %630 = vmatpush1.msra.mxu0 0.0
          %631 = vmatprep.subr.mxu0 0.0
          %632 = vmatpush1.msra.mxu0 0.0
          %633 = vmatprep.subr.mxu0 0.0
          %634 = vmatpush1.msra.mxu0 0.0
          %635 = vmatprep.subr.mxu0 0.0
          %636 = vmatpush1.msra.mxu0 0.0
          %637 = vmatprep.subr.mxu0 0.0
          %638 = vmatpush1.msra.mxu0 0.0
          %639 = vmatprep.subr.mxu0 0.0
          %640 = vmatpush1.msra.mxu0 0.0
          %641 = vmatprep.subr.mxu0 0.0
          %642 = vmatpush1.msra.mxu0 0.0
          %643 = vmatprep.subr.mxu0 0.0
          %644 = vmatpush1.msra.mxu0 0.0
          %645 = vmatprep.subr.mxu0 0.0
          %646 = vmatpush1.msra.mxu0 0.0
          %647 = vmatprep.subr.mxu0 0.0
          %648 = vmatpush1.msra.mxu0 0.0
          %649 = vmatprep.subr.mxu0 0.0
          %650 = vmatpush1.msra.mxu0 0.0
          %651 = vmatprep.subr.mxu0 0.0
          %652 = vmatpush1.msra.mxu0 0.0
          %653 = vmatprep.subr.mxu0 0.0
          %654 = vmatpush1.msra.mxu0 0.0
          %655 = vmatprep.subr.mxu0 0.0
          %656 = vmatpush1.msra.mxu0 0.0
          %657 = vmatprep.subr.mxu0 0.0
          %658 = vmatpush1.msra.mxu0 0.0
          %659 = vmatprep.subr.mxu0 0.0
          %660 = vmatpush1.msra.mxu0 0.0
          %661 = vmatprep.mubr.f32.mxu0 0.0
          %662 = vmatmul.mubr.f32.gmra.mrb[0].mxu0 %v595
          %v663 = vpop.f32.mrb[0].mxu0
          %v664 = vadd.f32 0.0, %v663
          %v665 = vpop.f32.mrb[0].mxu0
          %666 = vdwg.mxu0
          %s667 = sld [smem:[#allocation4 + %s39]]
          %s668 = smul.u32 %s667, 8
          %s669 = scalar_lea.vmem [#allocation2], %s668
          %v670 = vld [vmem:[%s669] sm:$0xff]
          %v671 = vadd.f32 %v670, %v664
          %672 = vst [vmem:[%s669] sm:$0xff] %v671
        $region64: #{_tree_forward.1} parent=43 // pred_fallthru
          _
        %v673 = vld [vmem:[%s321] sm:$0xff]
        %vm674 = vcmask 64512
        %v676 = vsel %vm674, %v673, 0
        %678 = vmatprep.subr.mxu0 0.0
        %679 = vmatpush1.msra.mxu0 %v586
        %680 = vmatprep.subr.mxu0 0.0
        %681 = vmatpush1.msra.mxu0 0.0
        %682 = vmatprep.subr.mxu0 0.0
        %683 = vmatpush1.msra.mxu0 0.0
        %684 = vmatprep.subr.mxu0 0.0
        %685 = vmatpush1.msra.mxu0 0.0
        %686 = vmatprep.subr.mxu0 0.0
        %687 = vmatpush1.msra.mxu0 0.0
        %688 = vmatprep.subr.mxu0 0.0
        %689 = vmatpush1.msra.mxu0 0.0
        %690 = vmatprep.subr.mxu0 0.0
        %691 = vmatpush1.msra.mxu0 0.0
        %692 = vmatprep.subr.mxu0 0.0
        %693 = vmatpush1.msra.mxu0 0.0
        %694 = vmatprep.subr.mxu0 0.0
        %695 = vmatpush1.msra.mxu0 0.0
        %696 = vmatprep.subr.mxu0 0.0
        %697 = vmatpush1.msra.mxu0 0.0
        %698 = vmatprep.subr.mxu0 0.0
        %699 = vmatpush1.msra.mxu0 0.0
        %700 = vmatprep.subr.mxu0 0.0
        %701 = vmatpush1.msra.mxu0 0.0
        %702 = vmatprep.subr.mxu0 0.0
        %703 = vmatpush1.msra.mxu0 0.0
        %704 = vmatprep.subr.mxu0 0.0
        %705 = vmatpush1.msra.mxu0 0.0
        %706 = vmatprep.subr.mxu0 0.0
        %707 = vmatpush1.msra.mxu0 0.0
        %708 = vmatprep.subr.mxu0 0.0
        %709 = vmatpush1.msra.mxu0 0.0
        %710 = vmatprep.subr.mxu0 0.0
        %711 = vmatpush1.msra.mxu0 0.0
        %712 = vmatprep.subr.mxu0 0.0
        %713 = vmatpush1.msra.mxu0 0.0
        %714 = vmatprep.subr.mxu0 0.0
        %715 = vmatpush1.msra.mxu0 0.0
        %716 = vmatprep.subr.mxu0 0.0
        %717 = vmatpush1.msra.mxu0 0.0
        %718 = vmatprep.subr.mxu0 0.0
        %719 = vmatpush1.msra.mxu0 0.0
        %720 = vmatprep.subr.mxu0 0.0
        %721 = vmatpush1.msra.mxu0 0.0
        %722 = vmatprep.subr.mxu0 0.0
        %723 = vmatpush1.msra.mxu0 0.0
        %724 = vmatprep.subr.mxu0 0.0
        %725 = vmatpush1.msra.mxu0 0.0
        %726 = vmatprep.subr.mxu0 0.0
        %727 = vmatpush1.msra.mxu0 0.0
        %728 = vmatprep.subr.mxu0 0.0
        %729 = vmatpush1.msra.mxu0 0.0
        %730 = vmatprep.subr.mxu0 0.0
        %731 = vmatpush1.msra.mxu0 0.0
        %732 = vmatprep.subr.mxu0 0.0
        %733 = vmatpush1.msra.mxu0 0.0
        %734 = vmatprep.subr.mxu0 0.0
        %735 = vmatpush1.msra.mxu0 0.0
        %736 = vmatprep.subr.mxu0 0.0
        %737 = vmatpush1.msra.mxu0 0.0
        %738 = vmatprep.subr.mxu0 0.0
        %739 = vmatpush1.msra.mxu0 0.0
        %740 = vmatprep.subr.mxu0 0.0
        %741 = vmatpush1.msra.mxu0 0.0
        %742 = vmatprep.mubr.f32.mxu0 0.0
        %743 = vmatmul.mubr.f32.gmra.mrb[0].mxu0 %v676
        %v744 = vpop.f32.mrb[0].mxu0
        %v745 = vadd.f32 0.0, %v744
        %v746 = vpop.f32.mrb[0].mxu0
        %747 = vdwg.mxu0
        %v748 = vtanh.pop %v745
        %749 = vst [vmem:[%s368] sm:$0xff] %v748
        %s750 = sld [smem:[#allocation5 + %s39]]
        %p751 = scmp.eq.s32.totalorder %s750, 1
        // Predicated region
        $region65: #{_tree_forward.1} parent=43 // pred_check
          %p752 = pneg %p751
        $region66: #{_tree_forward.1} parent=43 // pred_check_branch
          %754 = sbr.rel (%p752) target = $region68
        $region67: #{_tree_forward.1} parent=43 // pred_region
          %v755 = vld [vmem:[#allocation13] sm:$0xff]
          %v756 = vmax.f32 %v755, %v748
          %757 = vst [vmem:[#allocation13] sm:$0xff] %v756
        $region68: #{_tree_forward.1} parent=43 // pred_fallthru
          _
        %s758 = sand.u32 %s193, 1
        %s759 = scalar_lea.sflag [#allocation8], %s758
        %s760 = sand.u32 %s193, 1
        %s761 = smul.addr %s760, 8
        %s762 = scalar_lea.vmem [#allocation12], %s761
        // Predicated region
        $region69: #{_tree_forward.1} parent=43 // pred_check
          %p763 = pneg %p203
        $region70: #{_tree_forward.1} parent=43 // pred_check_branch
          %765 = sbr.rel (%p763) target = $region72
        $region71: #{_tree_forward.1} parent=43 // pred_region
          %s767 = ssub.s32 128, 128
          %768 = vsyncadd %s759, %s767
          %s769 = smul.addr %s39, 128
          %s770 = scalar_lea.hbm %s8, %s769
          %s772 = sshll.u32 %s762, 4
          %s773 = int_to_ptr.vmem [resolvable:$true] %s772
          %775 = dma.vmem_to_hbm [thread:$0]  %s773, 128, %s770, %s759
        $region72: #{_tree_forward.1} parent=43 // pred_fallthru
          _
        // Predicated region
        $region73: #{_tree_forward.1} parent=43 // pred_check
          %p776 = pneg %p224
        $region74: #{_tree_forward.1} parent=43 // pred_check_branch
          %778 = sbr.rel (%p776) target = $region76
        $region75: #{_tree_forward.1} parent=43 // pred_region
          %s780 = ssub.s32 128, 128
          %781 = vsyncadd [#allocation14], %s780
          %s783 = sshll.u32 [#allocation13], 4
          %s784 = int_to_ptr.vmem [resolvable:$true] %s783
          %786 = dma.vmem_to_hbm [thread:$0]  %s784, 128, %s9, [#allocation14]
        $region76: #{_tree_forward.1} parent=43 // pred_fallthru
          _
        // Predicated region
        $region77: #{_tree_forward.1} parent=43 // pred_check
          %p787 = pneg %p224
        $region78: #{_tree_forward.1} parent=43 // pred_check_branch
          %789 = sbr.rel (%p787) target = $region80
        $region79: #{_tree_forward.1} parent=43 // pred_region
          %790 = dma.done [#allocation14], 128
        $region80: #{_tree_forward.1} parent=43 // pred_fallthru
          _
      $region44: #{_tree_forward.1} parent=5 // pred_fallthru
        _
      %p791 = scmp.le.s32.totalorder 2, %s34
      // Predicated region
      $region81: #{_tree_forward.1} parent=5 // pred_check
        %p792 = pneg %p791
      $region82: #{_tree_forward.1} parent=5 // pred_check_branch
        %794 = sbr.rel (%p792) target = $region84
      $region83: #{_tree_forward.1} parent=5 // pred_region
        %s795 = ssub.s32 %s34, 2
        // Predicated region
        $region85: #{_tree_forward.1} parent=83 // pred_check
          %p796 = pneg %p209
        $region86: #{_tree_forward.1} parent=83 // pred_check_branch
          %798 = sbr.rel (%p796) target = $region88
        $region87: #{_tree_forward.1} parent=83 // pred_region
          %s799 = sand.u32 %s194, 1
          %s800 = scalar_lea.sflag [#allocation8], %s799
          %s801 = sand.u32 %s194, 1
          %s802 = smul.addr %s801, 8
          %s803 = scalar_lea.vmem [#allocation12], %s802
          %804 = dma.done %s800, 128
        $region88: #{_tree_forward.1} parent=83 // pred_fallthru
          _
      $region84: #{_tree_forward.1} parent=5 // pred_fallthru
        _
    $region6: #{_tree_forward.1} parent=1 // loop_footer
      %s38 = sadd.s32 1, %s34
    $region7: #{_tree_forward.1} parent=1 // loop_footer_branch
      %33 = sbr.rel target = $region3
    $region8: #{_tree_forward.1} parent=1 // loop_exit
      _
    %805 = vsyncpa [#allocation7], 1
    %s806 = scalar_lea.sflag [#allocation7], 1
    %807 = vsyncpa %s806, 1
    %808 = vsyncpa [#allocation10], 1
    %809 = vsyncpa [#allocation8], 1
    %s810 = scalar_lea.sflag [#allocation8], 1
    %811 = vsyncpa %s810, 1
    %812 = vsyncpa [#allocation14], 1

</llo_original>
